<compile_context>
chip_gen: v5e
topology: v5e:2x2
jax: 0.10.0
libtpu: 0.0.40
codegen_flags: <defaults>
</compile_context>

<pallas_src>
import math
from functools import partial

import jax
import jax.numpy as jnp
from jax.experimental import pallas as pl
from jax.experimental.pallas import tpu as pltpu

_UNROLL = 8            # chunk width for the gather / DMA-issue loops
_NSEM = 8              # rotating DMA semaphore set (fallback path)


# ---------------------------------------------------------------------------
# Kernel helpers
# ---------------------------------------------------------------------------

def _pos_tile(pos_ref, t, *, tile_m, pos_blocks, pos_resident):
    """Positional-embedding tile for grid step t."""
    if pos_resident:
        # Whole (S_pad, D) PE table is VMEM resident (fetched once); slice in-core.
        off = pl.multiple_of((t % pos_blocks) * tile_m, 8)
        return pos_ref[pl.ds(off, tile_m), :]
    # Auto-pipelined (tile_m, D) tile.
    return pos_ref[...]


def _finish(t, gbuf, pos_ref, out_ref, *, scale, lowest, tile_m, pos_blocks,
            pos_resident):
    """TokenEmbedding scale+bias, positional add, store — full tile on the VPU."""
    pe = _pos_tile(pos_ref, t, tile_m=tile_m, pos_blocks=pos_blocks,
                   pos_resident=pos_resident).astype(jnp.float32)
    emb = gbuf[...].astype(jnp.float32) * scale + lowest
    out_ref[...] = (emb + pe).astype(out_ref.dtype)


# ---------------------------------------------------------------------------
# Fast path: table fully VMEM resident, in-core row gather (no DMAs)
# ---------------------------------------------------------------------------

def _embedding_kernel_resident(tok_ref, table_ref, pos_ref, out_ref, gbuf, *,
                               scale, lowest, tile_m, pos_blocks, pos_resident):
    """tok_ref  : (M,) int32 token ids in SMEM (scalar prefetch)
       table_ref: (V, D) embedding table in VMEM (constant block index)
       pos_ref  : (S_pad, D) resident PE table or (tile_m, D) pipelined tile
       out_ref  : (tile_m, D) output tile
       gbuf     : (tile_m, D) VMEM gather buffer (scratch)
    """
    t = pl.program_id(0)
    base = t * tile_m

    # In-core row gather: one dynamic VMEM slice per token — no DMA descriptors,
    # no semaphores.  Chunk-unrolled so the LLO scheduler can co-issue the SMEM
    # id reads, address math and vld/vst pairs.
    # TODO(synk): a vectorized sublane gather would pack 8 rows/vreg; kept as
    #             scalar-indexed slices for portable lowering.
    @pl.loop(0, tile_m // _UNROLL)
    def _gather(c):
        mb = pl.multiple_of(c * _UNROLL, _UNROLL)
        for u in range(_UNROLL):
            m = mb + u
            row = tok_ref[base + m]                       # SMEM scalar read
            gbuf[pl.ds(m, 1), :] = table_ref[pl.ds(row, 1), :]

    _finish(t, gbuf, pos_ref, out_ref, scale=scale, lowest=lowest,
            tile_m=tile_m, pos_blocks=pos_blocks, pos_resident=pos_resident)


# ---------------------------------------------------------------------------
# Fallback: table stays in HBM, per-row async-DMA gather
# ---------------------------------------------------------------------------

def _embedding_kernel_hbm(tok_ref, table_hbm, pos_ref, out_ref, gbuf, sems, *,
                          scale, lowest, tile_m, pos_blocks, pos_resident):
    t = pl.program_id(0)
    base = t * tile_m

    # Issue all row-gather DMAs for this tile (rotating _NSEM-deep semaphore set,
    # chunk-unrolled issue loop), then wait on all of them with fixed-source
    # waiters — wait() only needs the semaphore + dst shape, so no tok_ref
    # re-read / src address rebuild after the first .wait().
    @pl.loop(0, tile_m // _UNROLL)
    def _issue(c):
        mb = pl.multiple_of(c * _UNROLL, _UNROLL)
        for u in range(_UNROLL):
            m = mb + u
            row = tok_ref[base + m]
            pltpu.make_async_copy(table_hbm.at[pl.ds(row, 1), :],
                                  gbuf.at[pl.ds(m, 1), :],
                                  sems.at[u]).start()

    @pl.loop(0, tile_m // _UNROLL)
    def _wait(c):
        mb = pl.multiple_of(c * _UNROLL, _UNROLL)
        for u in range(_UNROLL):
            pltpu.make_async_copy(table_hbm.at[pl.ds(0, 1), :],   # fixed source
                                  gbuf.at[pl.ds(mb + u, 1), :],
                                  sems.at[u]).wait()

    _finish(t, gbuf, pos_ref, out_ref, scale=scale, lowest=lowest,
            tile_m=tile_m, pos_blocks=pos_blocks, pos_resident=pos_resident)


# ---------------------------------------------------------------------------
# Wrapper
# ---------------------------------------------------------------------------

def _vmem_capacity_bytes(default_bytes=64 * 1024 * 1024):
    """Per-core VMEM capacity; conservative 64 MiB (v7x) if the query fails."""
    try:
        return int(pltpu.get_tpu_info().vmem_capacity_bytes)
    except Exception:
        return default_bytes


def _choose_tile_m(s_pad, per_row_bytes, budget_bytes, cap_rows=256):
    """Largest multiple-of-8 divisor of s_pad that is <= cap_rows and fits."""
    best = 8
    t = 8
    while t <= min(s_pad, cap_rows):
        if s_pad % t == 0 and t * per_row_bytes <= budget_bytes:
            best = t
        t += 8
    return best


def embedding_layer(tokens, table, pos_embed, pad_id, *, lowest=1e-13,
                    out_dtype=jnp.float32, tile_m=None, force_hbm_gather=False):
    """EmbeddingLayer.forward — returns (embeddings, attention_mask)."""
    B, S = tokens.shape
    V, D = table.shape
    assert pos_embed.shape[0] >= S and pos_embed.shape[1] == D
    scale = float(math.sqrt(D))

    # --- pad the sequence axis to a multiple of 8 so every block is vreg-aligned
    S_pad = ((S + 7) // 8) * 8
    pos = pos_embed[:S, :].astype(jnp.float32)
    if S_pad != S:
        pos = jnp.pad(pos, ((0, S_pad - S), (0, 0)))
        tokens_p = jnp.pad(tokens, ((0, 0), (0, S_pad - S)))
    else:
        tokens_p = tokens
    M = B * S_pad
    # Clamp so a bad id can never index outside the table (PyTorch would raise).
    tokens_flat = jnp.clip(tokens_p.reshape(M), 0, V - 1).astype(jnp.int32)

    # --- VMEM budgeting: residency decisions, tile size, vmem limit (per chip) --
    cap = _vmem_capacity_bytes()
    usable = int(cap * 0.75)                       # headroom for Mosaic internals
    t_item = jnp.dtype(table.dtype).itemsize
    o_item = jnp.dtype(out_dtype).itemsize

    table_res_bytes = 2 * V * D * t_item           # 2x: double-buffer accounting
    pos_res_bytes = 2 * S_pad * D * 4
    table_resident = (not force_hbm_gather) and (table_res_bytes <= usable // 2)
    pos_resident = pos_res_bytes <= usable // 4

    per_row = D * (t_item + 2 * o_item + (0 if pos_resident else 2 * 4))
    fixed = (table_res_bytes if table_resident else 0) + \
            (pos_res_bytes if pos_resident else 0)
    if tile_m is None:
        tile_m = _choose_tile_m(S_pad, per_row, max(usable - fixed, 8 * per_row))
    assert tile_m % 8 == 0 and S_pad % tile_m == 0, \
        "tile_m must be a multiple of 8 that divides the padded seq_len"

    need = fixed + tile_m * per_row
    vmem_limit = max(32 * 1024 * 1024, need + 8 * 1024 * 1024)
    vmem_limit = int(min(vmem_limit, int(cap * 0.95)))

    num_tiles = M // tile_m
    pos_blocks = S_pad // tile_m

    # --- specs ----------------------------------------------------------------
    if pos_resident:
        # Constant block index -> fetched from HBM once (S*D bytes, not B*S*D).
        pos_spec = pl.BlockSpec((S_pad, D), lambda t, tok: (0, 0))
    else:
        pos_spec = pl.BlockSpec((tile_m, D), lambda t, tok: (t % pos_blocks, 0))

    common = dict(scale=scale, lowest=lowest, tile_m=tile_m,
                  pos_blocks=pos_blocks, pos_resident=pos_resident)

    if table_resident:
        kernel = partial(_embedding_kernel_resident, **common)
        table_spec = pl.BlockSpec((V, D), lambda t, tok: (0, 0))     # resident
        scratch = [pltpu.VMEM((tile_m, D), table.dtype)]
    else:
        kernel = partial(_embedding_kernel_hbm, **common)
        table_spec = pl.BlockSpec(memory_space=pl.ANY)               # stays in HBM
        scratch = [pltpu.VMEM((tile_m, D), table.dtype),
                   pltpu.SemaphoreType.DMA((_NSEM,))]

    grid_spec = pltpu.PrefetchScalarGridSpec(
        num_scalar_prefetch=1,          # token ids -> SMEM; also fed to index_maps
        grid=(num_tiles,),
        in_specs=[table_spec, pos_spec],
        out_specs=pl.BlockSpec((tile_m, D), lambda t, tok: (t, 0)),
        scratch_shapes=scratch,
    )

    out_flat = pl.pallas_call(
        kernel,
        out_shape=jax.ShapeDtypeStruct((M, D), out_dtype),
        grid_spec=grid_spec,
        compiler_params=pltpu.CompilerParams(
            dimension_semantics=("parallel",),   # tiles are independent (2 TCs on v7x)
            vmem_limit_bytes=vmem_limit,
        ),
    )(tokens_flat, table, pos)

    out = out_flat.reshape(B, S_pad, D)[:, :S, :]
    # attention_mask = token_tensor.ne(pad_id) — trivial VPU op in the wrapper
    # (int32 here vs torch's int64).
    mask = (tokens != pad_id).astype(jnp.int32)
    return out, mask


def make_sinusoidal_embedding(max_len, embed_dim):
    # Faithful vectorization of PositionalEmbeddingSubLayer.makeSinusiodalEmbedding
    pe = jnp.zeros((max_len, embed_dim), jnp.float32)
    pos = jnp.arange(max_len, dtype=jnp.float32)[:, None]
    even_num = jnp.arange((embed_dim + 1) // 2, dtype=jnp.float32)[None, :]
    odd_num = jnp.arange(embed_dim // 2, dtype=jnp.float32)[None, :]
    pe = pe.at[:, 0::2].set(jnp.sin(pos / 10000.0 ** (2.0 * even_num / embed_dim)))
    pe = pe.at[:, 1::2].set(jnp.cos(pos / 10000.0 ** (2.0 * odd_num / embed_dim)))
    return pe


if __name__ == "__main__":
    B, S = 2, 8          # batch, seq_len
    V, D = 64, 32        # vocab_size, embed_dim
    MAX_LEN = 16
    PAD_ID = 0

    key = jax.random.PRNGKey(0)
    k_tok, k_tab = jax.random.split(key)

    tokens = jax.random.randint(k_tok, (B, S), 0, V, dtype=jnp.int32)
    tokens = tokens.at[0, -2:].set(PAD_ID)          # ensure some padding positions

    # nn.Embedding weights ~ N(0,1); padding_idx row initialized to zero.
    table = jax.random.normal(k_tab, (V, D), dtype=jnp.float32)
    table = table.at[PAD_ID, :].set(0.0)

    # args.is_sinusoidal == True -> fixed sinusoidal positional table.
    pos_full = make_sinusoidal_embedding(MAX_LEN, D)

    def reference(tok, s):
        return table[tok] * math.sqrt(D) + 1e-13 + pos_full[:s, :][None, :, :]

    # 1) VMEM-resident-table fast path (the one exercised at realistic-but-small tables).
    out, mask = embedding_layer(tokens, table, pos_full, PAD_ID)
    out, mask = jax.block_until_ready((out, mask))
    assert out.shape == (B, S, D) and mask.shape == (B, S)
    assert jnp.allclose(out, reference(tokens, S), atol=1e-5, rtol=1e-5), "resident-path mismatch"
    assert bool(jnp.all(mask == (tokens != PAD_ID).astype(jnp.int32))), "mask mismatch"

    # 2) HBM-gather fallback (forced, covers the table-too-big-for-VMEM case).
    out_h, _ = embedding_layer(tokens, table, pos_full, PAD_ID, force_hbm_gather=True)
    out_h = jax.block_until_ready(out_h)
    assert jnp.allclose(out_h, reference(tokens, S), atol=1e-5, rtol=1e-5), "hbm-path mismatch"

    # 3) Non-multiple-of-8 seq_len (exercises the pad-to-8 / tail-discard logic).
    S2 = 12
    tokens2 = jax.random.randint(jax.random.PRNGKey(1), (B, S2), 0, V, dtype=jnp.int32)
    out2, mask2 = embedding_layer(tokens2, table, pos_full, PAD_ID)
    out2 = jax.block_until_ready(out2)
    assert out2.shape == (B, S2, D) and mask2.shape == (B, S2)
    assert jnp.allclose(out2, reference(tokens2, S2), atol=1e-5, rtol=1e-5), "padded-seq mismatch"

    print("KERNEL_OK")
</pallas_src>

<mosaic_0001>
module attributes {stable_mosaic.version = 11 : i64} {
  func.func @_embedding_kernel_resident(%arg0: i32, %arg1: memref<16xi32, #tpu.memory_space<smem>>, %arg2: memref<64x32xf32, #tpu.memory_space<vmem>>, %arg3: memref<8x32xf32, #tpu.memory_space<vmem>>, %arg4: memref<8x32xf32, #tpu.memory_space<vmem>>, %arg5: memref<8x32xf32, #tpu.memory_space<vmem>>) attributes {dimension_semantics = [#tpu.dimension_semantics<parallel>], iteration_bounds = array<i64: 2>, scalar_prefetch = 1 : i64, scratch_operands = 1 : i64, tpu.core_type = #tpu.core_type<tc>, window_params = [{pipeline_mode = #tpu.pipeline_mode<synchronous>, transform_indices = @transform_0, window_bounds = array<i64: 64, 32>}, {pipeline_mode = #tpu.pipeline_mode<synchronous>, transform_indices = @transform_1, window_bounds = array<i64: 8, 32>}, {transform_indices = @transform_2, window_bounds = array<i64: 8, 32>}]} {
    %c8_i32 = arith.constant 8 : i32
    %0 = arith.muli %arg0, %c8_i32 : i32
    %c0_i32 = arith.constant 0 : i32
    %c1_i32 = arith.constant 1 : i32
    %1 = arith.muli %c0_i32, %c1_i32 : i32
    %c0_i32_0 = arith.constant 0 : i32
    %2 = arith.addi %c0_i32_0, %1 : i32
    %c8_i32_1 = arith.constant 8 : i32
    %3 = arith.muli %2, %c8_i32_1 : i32
    %4 = tpu.assume_multiple %3, 8 : i32
    %c0_i32_2 = arith.constant 0 : i32
    %5 = arith.addi %4, %c0_i32_2 : i32
    %6 = arith.addi %0, %5 : i32
    %7 = arith.index_cast %6 : i32 to index
    %8 = memref.load %arg1[%7] : memref<16xi32, #tpu.memory_space<smem>>
    %9 = arith.index_cast %8 : i32 to index
    %c0 = arith.constant 0 : index
    %10 = vector.load %arg2[%9, %c0] : memref<64x32xf32, #tpu.memory_space<vmem>>, vector<1x32xf32>
    %11 = arith.index_cast %5 : i32 to index
    %c0_3 = arith.constant 0 : index
    %12 = vector.load %arg5[%11, %c0_3] : memref<8x32xf32, #tpu.memory_space<vmem>>, vector<1x32xf32>
    tpu.vector_store %arg5[%11, %c0_3], %10 {strides = array<i32>} : memref<8x32xf32, #tpu.memory_space<vmem>>, vector<1x32xf32>,
    %c1_i32_4 = arith.constant 1 : i32
    %13 = arith.addi %4, %c1_i32_4 : i32
    %14 = arith.addi %0, %13 : i32
    %15 = arith.index_cast %14 : i32 to index
    %16 = memref.load %arg1[%15] : memref<16xi32, #tpu.memory_space<smem>>
    %17 = arith.index_cast %16 : i32 to index
    %c0_5 = arith.constant 0 : index
    %18 = vector.load %arg2[%17, %c0_5] : memref<64x32xf32, #tpu.memory_space<vmem>>, vector<1x32xf32>
    %19 = arith.index_cast %13 : i32 to index
    %c0_6 = arith.constant 0 : index
    %20 = vector.load %arg5[%19, %c0_6] : memref<8x32xf32, #tpu.memory_space<vmem>>, vector<1x32xf32>
    tpu.vector_store %arg5[%19, %c0_6], %18 {strides = array<i32>} : memref<8x32xf32, #tpu.memory_space<vmem>>, vector<1x32xf32>,
    %c2_i32 = arith.constant 2 : i32
    %21 = arith.addi %4, %c2_i32 : i32
    %22 = arith.addi %0, %21 : i32
    %23 = arith.index_cast %22 : i32 to index
    %24 = memref.load %arg1[%23] : memref<16xi32, #tpu.memory_space<smem>>
    %25 = arith.index_cast %24 : i32 to index
    %c0_7 = arith.constant 0 : index
    %26 = vector.load %arg2[%25, %c0_7] : memref<64x32xf32, #tpu.memory_space<vmem>>, vector<1x32xf32>
    %27 = arith.index_cast %21 : i32 to index
    %c0_8 = arith.constant 0 : index
    %28 = vector.load %arg5[%27, %c0_8] : memref<8x32xf32, #tpu.memory_space<vmem>>, vector<1x32xf32>
    tpu.vector_store %arg5[%27, %c0_8], %26 {strides = array<i32>} : memref<8x32xf32, #tpu.memory_space<vmem>>, vector<1x32xf32>,
    %c3_i32 = arith.constant 3 : i32
    %29 = arith.addi %4, %c3_i32 : i32
    %30 = arith.addi %0, %29 : i32
    %31 = arith.index_cast %30 : i32 to index
    %32 = memref.load %arg1[%31] : memref<16xi32, #tpu.memory_space<smem>>
    %33 = arith.index_cast %32 : i32 to index
    %c0_9 = arith.constant 0 : index
    %34 = vector.load %arg2[%33, %c0_9] : memref<64x32xf32, #tpu.memory_space<vmem>>, vector<1x32xf32>
    %35 = arith.index_cast %29 : i32 to index
    %c0_10 = arith.constant 0 : index
    %36 = vector.load %arg5[%35, %c0_10] : memref<8x32xf32, #tpu.memory_space<vmem>>, vector<1x32xf32>
    tpu.vector_store %arg5[%35, %c0_10], %34 {strides = array<i32>} : memref<8x32xf32, #tpu.memory_space<vmem>>, vector<1x32xf32>,
    %c4_i32 = arith.constant 4 : i32
    %37 = arith.addi %4, %c4_i32 : i32
    %38 = arith.addi %0, %37 : i32
    %39 = arith.index_cast %38 : i32 to index
    %40 = memref.load %arg1[%39] : memref<16xi32, #tpu.memory_space<smem>>
    %41 = arith.index_cast %40 : i32 to index
    %c0_11 = arith.constant 0 : index
    %42 = vector.load %arg2[%41, %c0_11] : memref<64x32xf32, #tpu.memory_space<vmem>>, vector<1x32xf32>
    %43 = arith.index_cast %37 : i32 to index
    %c0_12 = arith.constant 0 : index
    %44 = vector.load %arg5[%43, %c0_12] : memref<8x32xf32, #tpu.memory_space<vmem>>, vector<1x32xf32>
    tpu.vector_store %arg5[%43, %c0_12], %42 {strides = array<i32>} : memref<8x32xf32, #tpu.memory_space<vmem>>, vector<1x32xf32>,
    %c5_i32 = arith.constant 5 : i32
    %45 = arith.addi %4, %c5_i32 : i32
    %46 = arith.addi %0, %45 : i32
    %47 = arith.index_cast %46 : i32 to index
    %48 = memref.load %arg1[%47] : memref<16xi32, #tpu.memory_space<smem>>
    %49 = arith.index_cast %48 : i32 to index
    %c0_13 = arith.constant 0 : index
    %50 = vector.load %arg2[%49, %c0_13] : memref<64x32xf32, #tpu.memory_space<vmem>>, vector<1x32xf32>
    %51 = arith.index_cast %45 : i32 to index
    %c0_14 = arith.constant 0 : index
    %52 = vector.load %arg5[%51, %c0_14] : memref<8x32xf32, #tpu.memory_space<vmem>>, vector<1x32xf32>
    tpu.vector_store %arg5[%51, %c0_14], %50 {strides = array<i32>} : memref<8x32xf32, #tpu.memory_space<vmem>>, vector<1x32xf32>,
    %c6_i32 = arith.constant 6 : i32
    %53 = arith.addi %4, %c6_i32 : i32
    %54 = arith.addi %0, %53 : i32
    %55 = arith.index_cast %54 : i32 to index
    %56 = memref.load %arg1[%55] : memref<16xi32, #tpu.memory_space<smem>>
    %57 = arith.index_cast %56 : i32 to index
    %c0_15 = arith.constant 0 : index
    %58 = vector.load %arg2[%57, %c0_15] : memref<64x32xf32, #tpu.memory_space<vmem>>, vector<1x32xf32>
    %59 = arith.index_cast %53 : i32 to index
    %c0_16 = arith.constant 0 : index
    %60 = vector.load %arg5[%59, %c0_16] : memref<8x32xf32, #tpu.memory_space<vmem>>, vector<1x32xf32>
    tpu.vector_store %arg5[%59, %c0_16], %58 {strides = array<i32>} : memref<8x32xf32, #tpu.memory_space<vmem>>, vector<1x32xf32>,
    %c7_i32 = arith.constant 7 : i32
    %61 = arith.addi %4, %c7_i32 : i32
    %62 = arith.addi %0, %61 : i32
    %63 = arith.index_cast %62 : i32 to index
    %64 = memref.load %arg1[%63] : memref<16xi32, #tpu.memory_space<smem>>
    %65 = arith.index_cast %64 : i32 to index
    %c0_17 = arith.constant 0 : index
    %66 = vector.load %arg2[%65, %c0_17] : memref<64x32xf32, #tpu.memory_space<vmem>>, vector<1x32xf32>
    %67 = arith.index_cast %61 : i32 to index
    %c0_18 = arith.constant 0 : index
    %68 = vector.load %arg5[%67, %c0_18] : memref<8x32xf32, #tpu.memory_space<vmem>>, vector<1x32xf32>
    tpu.vector_store %arg5[%67, %c0_18], %66 {strides = array<i32>} : memref<8x32xf32, #tpu.memory_space<vmem>>, vector<1x32xf32>,
    %c1_i32_19 = arith.constant 1 : i32
    %c1_i32_20 = arith.constant 1 : i32
    %c0_i32_21 = arith.constant 0 : i32
    %69 = arith.cmpi eq, %c1_i32_20, %c0_i32_21 : i32
    %c1_i32_22 = arith.constant 1 : i32
    %70 = arith.select %69, %c1_i32_22, %c1_i32_20 : i32
    %71 = arith.remsi %arg0, %70 : i32
    %c0_i32_23 = arith.constant 0 : i32
    %72 = arith.cmpi ne, %71, %c0_i32_23 : i32
    %c0_i32_24 = arith.constant 0 : i32
    %73 = arith.cmpi slt, %71, %c0_i32_24 : i32
    %c0_i32_25 = arith.constant 0 : i32
    %74 = arith.cmpi slt, %70, %c0_i32_25 : i32
    %75 = arith.xori %73, %74 : i1
    %76 = arith.andi %75, %72 : i1
    %77 = arith.addi %71, %70 : i32
    %78 = arith.select %76, %77, %71 : i32
    %c8_i32_26 = arith.constant 8 : i32
    %79 = arith.muli %78, %c8_i32_26 : i32
    %80 = tpu.assume_multiple %79, 8 : i32
    %81 = arith.index_cast %80 : i32 to index
    %c0_27 = arith.constant 0 : index
    %82 = vector.load %arg3[%81, %c0_27] : memref<8x32xf32, #tpu.memory_space<vmem>>, vector<8x32xf32>
    %c0_28 = arith.constant 0 : index
    %c0_29 = arith.constant 0 : index
    %83 = vector.load %arg5[%c0_28, %c0_29] : memref<8x32xf32, #tpu.memory_space<vmem>>, vector<8x32xf32>
    %cst = arith.constant 5.65685415 : f32
    %84 = vector.broadcast %cst : f32 to vector<8x32xf32>
    %85 = arith.mulf %83, %84 : vector<8x32xf32>
    %cst_30 = arith.constant 9.99999982E-14 : f32
    %86 = vector.broadcast %cst_30 : f32 to vector<8x32xf32>
    %87 = arith.addf %85, %86 : vector<8x32xf32>
    %88 = arith.addf %87, %82 : vector<8x32xf32>
    %c0_31 = arith.constant 0 : index
    %c0_32 = arith.constant 0 : index
    %89 = vector.load %arg4[%c0_31, %c0_32] : memref<8x32xf32, #tpu.memory_space<vmem>>, vector<8x32xf32>
    tpu.vector_store %arg4[%c0_31, %c0_32], %88 {strides = array<i32>} : memref<8x32xf32, #tpu.memory_space<vmem>>, vector<8x32xf32>,
    return
  }
  func.func @transform_0(%arg0: i32, %arg1: memref<16xi32, #tpu.memory_space<smem>>) -> (i32, i32) {
    %c0_i32 = arith.constant 0 : i32
    %c0_i32_0 = arith.constant 0 : i32
    %c0_i32_1 = arith.constant 0 : i32
    return %c0_i32, %c0_i32_0 : i32, i32
  }
  func.func @transform_1(%arg0: i32, %arg1: memref<16xi32, #tpu.memory_space<smem>>) -> (i32, i32) {
    %c0_i32 = arith.constant 0 : i32
    %c0_i32_0 = arith.constant 0 : i32
    %c0_i32_1 = arith.constant 0 : i32
    return %c0_i32, %c0_i32_0 : i32, i32
  }
  func.func @transform_2(%arg0: i32, %arg1: memref<16xi32, #tpu.memory_space<smem>>) -> (i32, i32) {
    %c0_i32 = arith.constant 0 : i32
    %c0_i32_0 = arith.constant 0 : i32
    return %arg0, %c0_i32 : i32, i32
  }
}

</mosaic_0001>

<llo_original>
// kernel: tpu_custom_call.1
$region0: #{tpu_custom_call.1}
  #allocation0 [shape = 'u32[]', space=smem, size = 0x4, offset = 0x4, fixed_abs, tag = 'smem constant byte address 0x4 - core index']
  #allocation1 [shape = 'u32[72,128]{1,0:T(1,128)}', space=vmem, size = 0x9000, scoped, tag = 'internal scratch']
  #allocation2 [shape = 'f32[8,32]{1,0:T(8,128)}', space=vmem, size = 0x1000, scoped, tag = 'scratch operand']
  #allocation3 [shape = 's32[1]{0}', space=sflag, size = 0x4, scoped, tag = 'scoped memory for tpu_custom_call.1']
  #allocation4 [shape = 'u8[512]{0}', space=smem, size = 0x200, scoped, tag = 'prefetched SMEM operand 0']
  %s0 = inlined_call_operand.vmem [shape: s32[16], index: 0, kind: input, shape index: {}]
  %s1 = inlined_call_operand.vmem [shape: f32[64,32], index: 1, kind: input, shape index: {}]
  %s2 = inlined_call_operand.vmem [shape: f32[8,32], index: 2, kind: input, shape index: {}]
  %s3 = inlined_call_operand.hbm [shape: f32[16,32], index: 3, kind: output, shape index: {}]
  %s4 = sld [smem:[#allocation0]]
  $region41: #{tpu_custom_call.1} parent=0
    _
  %s6 = ssub.s32 1, %s4
  %s7 = scalar_select 0, %s6, %s4
  %s9 = sshll.u32 %s0, 4
  %s10 = int_to_ptr.vmem [resolvable:$true] %s9
  %12 = dma.vmem_to_smem %s10, 16, [#allocation4], [#allocation3]
  %14 = dma.done [#allocation3], 16
  %15 = sfence
  $region1: #{tpu_custom_call.1} parent=0
    #allocation5 [shape = 'u8[8192]{0}', space=vmem, size = 0x2000, scoped, tag = 'output window, operand 0']
    #allocation6 [shape = 's32[2]{0}', space=sflag, size = 0x8, scoped, tag = 'scoped memory for tpu_custom_call.1']
    %16 = vsyncpa [#allocation6], 0
    %s17 = scalar_lea.sflag [#allocation6], 1
    %18 = vsyncpa %s17, 0
    loop: start=0, step=1, limit=4
    $region2: #{tpu_custom_call.1} parent=1 // loop_pre_header
      _
    $region3: #{tpu_custom_call.1} parent=1 // loop_header
      %s20 = sphi 0, %s24
      %p21 = scmp.ge.s32.totalorder %s20, 4
      %s28 = sphi 0, %s28
      %s30 = sphi 0, %s28
      %s31 = sphi 0, %s30
      %s45 = sphi 0, %s31
      %s49 = sphi 0, %s49
      %s51 = sphi 0, %s49
      %s52 = sphi 0, %s51
      %s66 = sphi 0, %s52
      %s72 = sphi 0, %s74
      %s75 = sphi 0, %s72
      %s76 = sphi 0, %s75
      %s92 = sphi 0, %s76
    $region4: #{tpu_custom_call.1} parent=1 // loop_header_branch
      %23 = sbr.rel (%p21) target = $region8
    $region5: #{tpu_custom_call.1} parent=1 // loop_body
      %s25 = ssub.s32 %s20, 1
      %s26 = ssub.s32 %s20, 2
      %s27 = sadd.s32 %s20, 1
      %s29 = sadd.s32 %s28, 1
      %p32 = scmp.eq.s32.totalorder %s20, 1
      %p33 = scmp.ne.s32.totalorder %s28, %s30
      %p34 = scmp.eq.s32.totalorder %s20, 0
      %p35 = por %p33, %p34
      %p36 = scmp.ne.s32.totalorder %s28, %s30
      %p37 = scmp.eq.s32.totalorder %s25, 1
      %p38 = por %p36, %p37
      %p39 = scmp.ne.s32.totalorder %s30, %s31
      %p40 = scmp.eq.s32.totalorder %s25, 0
      %p41 = por %p39, %p40
      %p42 = scmp.ne.s32.totalorder %s30, %s31
      %p43 = scmp.eq.s32.totalorder %s26, 1
      %p44 = por %p42, %p43
      %p46 = scmp.ne.s32.totalorder %s31, %s45
      %p47 = scmp.eq.s32.totalorder %s26, 0
      %p48 = por %p46, %p47
      %s50 = sadd.s32 %s49, 1
      %p53 = scmp.eq.s32.totalorder %s20, 1
      %p54 = scmp.ne.s32.totalorder %s49, %s51
      %p55 = scmp.eq.s32.totalorder %s20, 0
      %p56 = por %p54, %p55
      %p57 = scmp.ne.s32.totalorder %s49, %s51
      %p58 = scmp.eq.s32.totalorder %s25, 1
      %p59 = por %p57, %p58
      %p60 = scmp.ne.s32.totalorder %s51, %s52
      %p61 = scmp.eq.s32.totalorder %s25, 0
      %p62 = por %p60, %p61
      %p63 = scmp.ne.s32.totalorder %s51, %s52
      %p64 = scmp.eq.s32.totalorder %s26, 1
      %p65 = por %p63, %p64
      %p67 = scmp.ne.s32.totalorder %s52, %s66
      %p68 = scmp.eq.s32.totalorder %s26, 0
      %p69 = por %p67, %p68
      %s70 = ssub.s32 %s20, %s27
      %p71 = scmp.eq.s32.totalorder %s70, 0
      %s73 = sadd.s32 %s72, 1
      %s74 = scalar_select %p71, %s72, %s73
      %p77 = pneg %p71
      %p78 = scmp.eq.s32.totalorder %s20, 1
      %p79 = por %p77, %p78
      %p80 = scmp.ne.s32.totalorder %s72, %s75
      %p81 = scmp.eq.s32.totalorder %s20, 0
      %p82 = por %p80, %p81
      %p83 = scmp.ne.s32.totalorder %s72, %s75
      %p84 = scmp.eq.s32.totalorder %s25, 1
      %p85 = por %p83, %p84
      %p86 = scmp.ne.s32.totalorder %s75, %s76
      %p87 = scmp.eq.s32.totalorder %s25, 0
      %p88 = por %p86, %p87
      %p89 = scmp.ne.s32.totalorder %s75, %s76
      %p90 = scmp.eq.s32.totalorder %s26, 1
      %p91 = por %p89, %p90
      %p93 = scmp.ne.s32.totalorder %s76, %s92
      %p94 = scmp.eq.s32.totalorder %s26, 0
      %p95 = por %p93, %p94
      %p96 = scmp.le.s32.totalorder 1, %s20
      %p97 = scmp.lt.s32.totalorder %s20, 3
      %p98 = pnand %p96, %p97
      %p99 = pneg %p98
      // Predicated region
      $region9: #{tpu_custom_call.1} parent=5 // pred_check
        _
      $region10: #{tpu_custom_call.1} parent=5 // pred_check_branch
        %101 = sbr.rel (%p98) target = $region12
      $region11: #{tpu_custom_call.1} parent=5 // pred_region
        %s102 = ssub.s32 %s20, 1
        // Predicated region
        $region13: #{tpu_custom_call.1} parent=11 // pred_check
          %p103 = pneg %p41
        $region14: #{tpu_custom_call.1} parent=11 // pred_check_branch
          %105 = sbr.rel (%p103) target = $region16
        $region15: #{tpu_custom_call.1} parent=11 // pred_region
          _
        $region16: #{tpu_custom_call.1} parent=11 // pred_fallthru
          _
        // Predicated region
        $region17: #{tpu_custom_call.1} parent=11 // pred_check
          %p106 = pneg %p62
        $region18: #{tpu_custom_call.1} parent=11 // pred_check_branch
          %108 = sbr.rel (%p106) target = $region20
        $region19: #{tpu_custom_call.1} parent=11 // pred_region
          _
        $region20: #{tpu_custom_call.1} parent=11 // pred_fallthru
          _
      $region12: #{tpu_custom_call.1} parent=5 // pred_fallthru
        _
      %p109 = scmp.lt.s32.totalorder %s20, 2
      // Predicated region
      $region21: #{tpu_custom_call.1} parent=5 // pred_check
        %p110 = pneg %p109
      $region22: #{tpu_custom_call.1} parent=5 // pred_check_branch
        %112 = sbr.rel (%p110) target = $region24
      $region23: #{tpu_custom_call.1} parent=5 // pred_region
        _
      $region24: #{tpu_custom_call.1} parent=5 // pred_fallthru
        _
      %p113 = scmp.le.s32.totalorder 1, %s20
      %p114 = scmp.lt.s32.totalorder %s20, 3
      %p115 = pnand %p113, %p114
      %p116 = pneg %p115
      // Predicated region
      $region25: #{tpu_custom_call.1} parent=5 // pred_check
        _
      $region26: #{tpu_custom_call.1} parent=5 // pred_check_branch
        %118 = sbr.rel (%p115) target = $region28
      $region27: #{tpu_custom_call.1} parent=5 // pred_region
        %s119 = ssub.s32 %s20, 1
        %p120 = pneg %p41
        %p121 = pneg %p38
        %p122 = pneg %p62
        %p123 = pneg %p59
        %p124 = pneg %p88
        %p125 = pneg %p85
        %s126 = sand.u32 %s75, 1
        %s127 = scalar_lea.sflag [#allocation6], %s126
        %s128 = sand.u32 %s75, 1
        %s129 = smul.addr %s128, 8
        %s130 = scalar_lea.vmem [#allocation5], %s129
        %s131 = smul.u32 %s25, 8
        %s132 = sadd.s32 %s131, 0
        %s133 = sld [smem:[#allocation4 + %s132]]
        %s134 = scalar_lea.vmem %s1, %s133
        %v135 = vld [vmem:[%s134] sm:$0x1]
        %vm136 = vcmask 253952
        %137 = vst.msk [vmem:[#allocation2] sm:$0x1] %vm136, %v135
        %s138 = sadd.s32 0, 1
        %s139 = sadd.s32 %s131, %s138
        %s140 = sld [smem:[#allocation4 + %s139]]
        %s141 = scalar_lea.vmem %s1, %s140
        %v142 = vld [vmem:[%s141] sm:$0x1]
        %s143 = scalar_lea.vmem [#allocation2], %s138
        %144 = vst.msk [vmem:[%s143] sm:$0x1] %vm136, %v142
        %s145 = sadd.s32 0, 2
        %s146 = sadd.s32 %s131, %s145
        %s147 = sld [smem:[#allocation4 + %s146]]
        %s148 = scalar_lea.vmem %s1, %s147
        %v149 = vld [vmem:[%s148] sm:$0x1]
        %s150 = scalar_lea.vmem [#allocation2], %s145
        %151 = vst.msk [vmem:[%s150] sm:$0x1] %vm136, %v149
        %s152 = sadd.s32 0, 3
        %s153 = sadd.s32 %s131, %s152
        %s154 = sld [smem:[#allocation4 + %s153]]
        %s155 = scalar_lea.vmem %s1, %s154
        %v156 = vld [vmem:[%s155] sm:$0x1]
        %s157 = scalar_lea.vmem [#allocation2], %s152
        %158 = vst.msk [vmem:[%s157] sm:$0x1] %vm136, %v156
        %s159 = sadd.s32 0, 4
        %s160 = sadd.s32 %s131, %s159
        %s161 = sld [smem:[#allocation4 + %s160]]
        %s162 = scalar_lea.vmem %s1, %s161
        %v163 = vld [vmem:[%s162] sm:$0x1]
        %s164 = scalar_lea.vmem [#allocation2], %s159
        %165 = vst.msk [vmem:[%s164] sm:$0x1] %vm136, %v163
        %s166 = sadd.s32 0, 5
        %s167 = sadd.s32 %s131, %s166
        %s168 = sld [smem:[#allocation4 + %s167]]
        %s169 = scalar_lea.vmem %s1, %s168
        %v170 = vld [vmem:[%s169] sm:$0x1]
        %s171 = scalar_lea.vmem [#allocation2], %s166
        %172 = vst.msk [vmem:[%s171] sm:$0x1] %vm136, %v170
        %s173 = sadd.s32 0, 6
        %s174 = sadd.s32 %s131, %s173
        %s175 = sld [smem:[#allocation4 + %s174]]
        %s176 = scalar_lea.vmem %s1, %s175
        %v177 = vld [vmem:[%s176] sm:$0x1]
        %s178 = scalar_lea.vmem [#allocation2], %s173
        %179 = vst.msk [vmem:[%s178] sm:$0x1] %vm136, %v177
        %s180 = sadd.s32 0, 7
        %s181 = sadd.s32 %s131, %s180
        %s182 = sld [smem:[#allocation4 + %s181]]
        %s183 = scalar_lea.vmem %s1, %s182
        %v184 = vld [vmem:[%s183] sm:$0x1]
        %s185 = scalar_lea.vmem [#allocation2], %s180
        %186 = vst.msk [vmem:[%s185] sm:$0x1] %vm136, %v184
        %v187 = vld [vmem:[%s2] sm:$0xff]
        %v188 = vld [vmem:[#allocation2] sm:$0xff]
        %v189 = vmul.f32 %v188, 5.656854
        %v190 = vadd.f32 %v189, 1e-13
        %v191 = vadd.f32 %v190, %v187
        %vm192 = vcmask 261120
        %193 = vst.msk [vmem:[%s130] sm:$0xff] %vm192, %v191
        %s194 = sand.u32 %s75, 1
        %s195 = scalar_lea.sflag [#allocation6], %s194
        %s196 = sand.u32 %s75, 1
        %s197 = smul.addr %s196, 8
        %s198 = scalar_lea.vmem [#allocation5], %s197
        // Predicated region
        $region29: #{tpu_custom_call.1} parent=27 // pred_check
          %p199 = pneg %p85
        $region30: #{tpu_custom_call.1} parent=27 // pred_check_branch
          %201 = sbr.rel (%p199) target = $region32
        $region31: #{tpu_custom_call.1} parent=27 // pred_region
          %203 = vsyncadd %s195, 0
          %s204 = smul.addr %s25, 8
          %s205 = scalar_lea.hbm %s3, %s204
          %s207 = sshll.u32 %s198, 4
          %s208 = int_to_ptr.vmem [resolvable:$true] %s207
          %s209 = sshll.u32 %s205, 4
          %s210 = int_to_ptr.hbm [resolvable:$true] %s209
          %212 = dma.vmem_to_hbm [thread:$0]  %s208, 128, %s210, %s195
        $region32: #{tpu_custom_call.1} parent=27 // pred_fallthru
          _
      $region28: #{tpu_custom_call.1} parent=5 // pred_fallthru
        _
      %p213 = scmp.le.s32.totalorder 2, %s20
      // Predicated region
      $region33: #{tpu_custom_call.1} parent=5 // pred_check
        %p214 = pneg %p213
      $region34: #{tpu_custom_call.1} parent=5 // pred_check_branch
        %216 = sbr.rel (%p214) target = $region36
      $region35: #{tpu_custom_call.1} parent=5 // pred_region
        %s217 = ssub.s32 %s20, 2
        // Predicated region
        $region37: #{tpu_custom_call.1} parent=35 // pred_check
          %p218 = pneg %p91
        $region38: #{tpu_custom_call.1} parent=35 // pred_check_branch
          %220 = sbr.rel (%p218) target = $region40
        $region39: #{tpu_custom_call.1} parent=35 // pred_region
          %s221 = sand.u32 %s76, 1
          %s222 = scalar_lea.sflag [#allocation6], %s221
          %s223 = sand.u32 %s76, 1
          %s224 = smul.addr %s223, 8
          %s225 = scalar_lea.vmem [#allocation5], %s224
          %227 = dma.done %s222, 128
        $region40: #{tpu_custom_call.1} parent=35 // pred_fallthru
          _
      $region36: #{tpu_custom_call.1} parent=5 // pred_fallthru
        _
    $region6: #{tpu_custom_call.1} parent=1 // loop_footer
      %s24 = sadd.s32 1, %s20
    $region7: #{tpu_custom_call.1} parent=1 // loop_footer_branch
      %19 = sbr.rel target = $region3
    $region8: #{tpu_custom_call.1} parent=1 // loop_exit
      _
    %228 = vsyncpa [#allocation6], 1
    %s229 = scalar_lea.sflag [#allocation6], 1
    %230 = vsyncpa %s229, 1

</llo_original>
